<compile_context>
chip_gen: v6e
topology: v6e:2x2x1
jax: 0.10.0
libtpu: 0.0.40
codegen_flags: <defaults>
</compile_context>

<pallas_src>
import functools

import jax
import jax.numpy as jnp
from jax.experimental import pallas as pl
from jax.experimental.pallas import tpu as pltpu


def _layernorm_kernel(x_ref, g_ref, b_ref, o_ref, *, eps):
    # x_ref: (tile_b, C, tile_hw) tile; normalize over C (axis=1) per
    # (batch row, lane/spatial position).  g_ref / b_ref: (1, C, 1).
    x = x_ref[...].astype(jnp.float32)
    mean = jnp.mean(x, axis=1, keepdims=True)
    centered = x - mean
    # PyTorch nn.LayerNorm: biased variance, eps inside rsqrt, affine last.
    var = jnp.mean(centered * centered, axis=1, keepdims=True)
    inv = jax.lax.rsqrt(var + eps)  # EUP slot; effectively free (mem-bound).
    gamma = g_ref[...].astype(jnp.float32)  # broadcasts over batch & lanes
    beta = b_ref[...].astype(jnp.float32)
    o_ref[...] = (centered * inv * gamma + beta).astype(o_ref.dtype)


def _round_up(x, m):
    return ((x + m - 1) // m) * m


def _pick_tiles(b, c, hw, dtype, *, target_block_bytes=2 << 20):
    """Pick (tile_b, tile_hw) so each in/out block is ~target_block_bytes.

    tile_hw is always a multiple of 128 (partial last block is Pallas-masked);
    tile_b folds batch rows in when C * HW alone is too small to reach the
    byte target.  With a 2 MiB per-buffer target the double-buffered
    in+out pipeline footprint is ~8 MiB: safe on v5e/v6e/v7x.
    """
    itemsize = jnp.dtype(dtype).itemsize
    row_bytes = c * itemsize                      # one lane column over all C
    hw_padded = _round_up(hw, 128)

    # Lane tile: as many 128-lane groups as fit the per-buffer byte target.
    lanes = (target_block_bytes // (row_bytes * 128)) * 128
    tile_hw = int(min(max(lanes, 128), hw_padded))

    # Batch tile: amortize per-step overhead when C * tile_hw is still small.
    block_bytes = tile_hw * row_bytes
    tile_b = int(max(1, min(b, target_block_bytes // max(block_bytes, 1))))
    return tile_b, tile_hw


def layer_norm_proxy(x_nchw, gamma, beta, *, eps=1e-5):
    """Equivalent of LayerNormProxy.forward: NCHW in, NCHW out (no transposes)."""
    b, c, h, w = x_nchw.shape
    hw = h * w
    x3 = x_nchw.reshape(b, c, hw)   # free reshape of contiguous NCHW
    g3 = gamma.reshape(1, c, 1)
    b3 = beta.reshape(1, c, 1)

    tile_b, tile_hw = _pick_tiles(b, c, hw, x3.dtype)
    grid = (pl.cdiv(b, tile_b), pl.cdiv(hw, tile_hw))

    itemsize = jnp.dtype(x3.dtype).itemsize
    block_bytes = tile_b * c * tile_hw * itemsize
    # Double-buffered input + output blocks, plus params and slack.  Floor at
    # 32 MiB (raises v5e's 16 MiB default scoped VMEM; still well under v7x's
    # 64 MiB per-TC physical VMEM for realistic C).
    needed = 4 * block_bytes + 2 * c * 4 + (1 << 20)
    vmem_limit = int(min(max(needed, 32 << 20), 128 << 20))

    cost = pl.CostEstimate(
        flops=int(8 * b * c * hw),
        transcendentals=int(b * hw),
        bytes_accessed=int(2 * b * c * hw * itemsize + 2 * c * itemsize),
    )

    out = pl.pallas_call(
        functools.partial(_layernorm_kernel, eps=eps),
        out_shape=jax.ShapeDtypeStruct((b, c, hw), x3.dtype),
        grid_spec=pltpu.PrefetchScalarGridSpec(
            num_scalar_prefetch=0,
            grid=grid,
            in_specs=[
                pl.BlockSpec((tile_b, c, tile_hw), lambda i, j: (i, 0, j)),
                pl.BlockSpec((1, c, 1), lambda i, j: (0, 0, 0)),
                pl.BlockSpec((1, c, 1), lambda i, j: (0, 0, 0)),
            ],
            out_specs=pl.BlockSpec((tile_b, c, tile_hw), lambda i, j: (i, 0, j)),
        ),
        compiler_params=pltpu.CompilerParams(
            # Both grid axes are independent -> shard across v7x's 2 TCs.
            dimension_semantics=("parallel", "parallel"),
            vmem_limit_bytes=vmem_limit,
        ),
        cost_estimate=cost,
    )(x3, g3, b3)

    return out.reshape(b, c, h, w)


def _reference(x, gamma, beta, eps=1e-5):
    # Pure-JAX reference matching the original module (transpose form).
    x_nhwc = jnp.transpose(x, (0, 2, 3, 1)).astype(jnp.float32)
    mean = jnp.mean(x_nhwc, axis=-1, keepdims=True)
    var = jnp.mean((x_nhwc - mean) ** 2, axis=-1, keepdims=True)
    y = (x_nhwc - mean) * jax.lax.rsqrt(var + eps) * gamma + beta
    return jnp.transpose(y, (0, 3, 1, 2)).astype(x.dtype)


if __name__ == "__main__":
    key = jax.random.PRNGKey(0)

    # Primary case (matches the module's typical small demo shape).
    B, C, H, W = 2, 4, 16, 16
    k1, k2 = jax.random.split(key)
    x = jax.random.normal(k1, (B, C, H, W), dtype=jnp.float32)
    gamma = jnp.ones((C,), dtype=jnp.float32)   # nn.LayerNorm default init
    beta = jnp.zeros((C,), dtype=jnp.float32)

    y = layer_norm_proxy(x, gamma, beta)
    jax.block_until_ready(y)
    assert jnp.allclose(y, _reference(x, gamma, beta), atol=1e-5, rtol=1e-5), \
        "mismatch vs reference (aligned case)"

    # Secondary case: non-128-aligned H*W and C not a multiple of 8, with
    # non-trivial affine params -> exercises the masked partial lane block and
    # padded-sublane reduction paths.
    B2, C2, H2, W2 = 2, 6, 10, 10
    k3, k4, k5 = jax.random.split(k2, 3)
    x2 = jax.random.normal(k3, (B2, C2, H2, W2), dtype=jnp.float32)
    gamma2 = jax.random.normal(k4, (C2,), dtype=jnp.float32)
    beta2 = jax.random.normal(k5, (C2,), dtype=jnp.float32)

    y2 = layer_norm_proxy(x2, gamma2, beta2)
    jax.block_until_ready(y2)
    assert jnp.allclose(y2, _reference(x2, gamma2, beta2), atol=1e-5, rtol=1e-5), \
        "mismatch vs reference (unaligned case)"

    print("KERNEL_OK")
</pallas_src>

<mosaic_0001>
module attributes {stable_mosaic.version = 11 : i64} {
  func.func @_layernorm_kernel(%arg0: i32, %arg1: i32, %arg2: memref<2x4x256xf32, #tpu.memory_space<vmem>>, %arg3: memref<1x4x1xf32, #tpu.memory_space<vmem>>, %arg4: memref<1x4x1xf32, #tpu.memory_space<vmem>>, %arg5: memref<2x4x256xf32, #tpu.memory_space<vmem>>) attributes {dimension_semantics = [#tpu.dimension_semantics<parallel>, #tpu.dimension_semantics<parallel>], iteration_bounds = array<i64: 1, 1>, scalar_prefetch = 0 : i64, scratch_operands = 0 : i64, tpu.core_type = #tpu.core_type<tc>, window_params = [{transform_indices = @transform_0, window_bounds = array<i64: 2, 4, 256>}, {pipeline_mode = #tpu.pipeline_mode<synchronous>, transform_indices = @transform_1, window_bounds = array<i64: 1, 4, 1>}, {pipeline_mode = #tpu.pipeline_mode<synchronous>, transform_indices = @transform_2, window_bounds = array<i64: 1, 4, 1>}, {transform_indices = @transform_3, window_bounds = array<i64: 2, 4, 256>}]} {
    %c0 = arith.constant 0 : index
    %c0_0 = arith.constant 0 : index
    %c0_1 = arith.constant 0 : index
    %0 = vector.load %arg2[%c0, %c0_0, %c0_1] : memref<2x4x256xf32, #tpu.memory_space<vmem>>, vector<2x4x256xf32>
    %cst = arith.constant dense<0.000000e+00> : vector<2x256xf32>
    %1 = vector.multi_reduction <add>, %0, %cst [1] : vector<2x4x256xf32> to vector<2x256xf32>
    %2 = vector.shape_cast %1 : vector<2x256xf32> to vector<2x1x256xf32>
    %cst_2 = arith.constant 4.000000e+00 : f32
    %3 = vector.broadcast %cst_2 : f32 to vector<2x1x256xf32>
    %4 = arith.divf %2, %3 : vector<2x1x256xf32>
    %5 = vector.broadcast %4 : vector<2x1x256xf32> to vector<2x4x256xf32>
    %6 = arith.subf %0, %5 : vector<2x4x256xf32>
    %7 = arith.mulf %6, %6 : vector<2x4x256xf32>
    %cst_3 = arith.constant dense<0.000000e+00> : vector<2x256xf32>
    %8 = vector.multi_reduction <add>, %7, %cst_3 [1] : vector<2x4x256xf32> to vector<2x256xf32>
    %9 = vector.shape_cast %8 : vector<2x256xf32> to vector<2x1x256xf32>
    %cst_4 = arith.constant 4.000000e+00 : f32
    %10 = vector.broadcast %cst_4 : f32 to vector<2x1x256xf32>
    %11 = arith.divf %9, %10 : vector<2x1x256xf32>
    %cst_5 = arith.constant 9.99999974E-6 : f32
    %12 = vector.broadcast %cst_5 : f32 to vector<2x1x256xf32>
    %13 = arith.addf %11, %12 : vector<2x1x256xf32>
    %14 = math.rsqrt %13 : vector<2x1x256xf32>
    %c0_6 = arith.constant 0 : index
    %c0_7 = arith.constant 0 : index
    %c0_8 = arith.constant 0 : index
    %15 = vector.load %arg3[%c0_6, %c0_7, %c0_8] : memref<1x4x1xf32, #tpu.memory_space<vmem>>, vector<1x4x1xf32>
    %c0_9 = arith.constant 0 : index
    %c0_10 = arith.constant 0 : index
    %c0_11 = arith.constant 0 : index
    %16 = vector.load %arg4[%c0_9, %c0_10, %c0_11] : memref<1x4x1xf32, #tpu.memory_space<vmem>>, vector<1x4x1xf32>
    %17 = vector.broadcast %14 : vector<2x1x256xf32> to vector<2x4x256xf32>
    %18 = arith.mulf %6, %17 : vector<2x4x256xf32>
    %19 = vector.broadcast %15 : vector<1x4x1xf32> to vector<2x4x256xf32>
    %20 = arith.mulf %18, %19 : vector<2x4x256xf32>
    %21 = vector.broadcast %16 : vector<1x4x1xf32> to vector<2x4x256xf32>
    %22 = arith.addf %20, %21 : vector<2x4x256xf32>
    %c0_12 = arith.constant 0 : index
    %c0_13 = arith.constant 0 : index
    %c0_14 = arith.constant 0 : index
    %23 = vector.load %arg5[%c0_12, %c0_13, %c0_14] : memref<2x4x256xf32, #tpu.memory_space<vmem>>, vector<2x4x256xf32>
    tpu.vector_store %arg5[%c0_12, %c0_13, %c0_14], %22 {strides = array<i32>} : memref<2x4x256xf32, #tpu.memory_space<vmem>>, vector<2x4x256xf32>,
    return
  }
  func.func @transform_0(%arg0: i32, %arg1: i32) -> (i32, i32, i32) {
    %c0_i32 = arith.constant 0 : i32
    %c0_i32_0 = arith.constant 0 : i32
    return %arg0, %c0_i32, %arg1 : i32, i32, i32
  }
  func.func @transform_1(%arg0: i32, %arg1: i32) -> (i32, i32, i32) {
    %c0_i32 = arith.constant 0 : i32
    %c0_i32_0 = arith.constant 0 : i32
    %c0_i32_1 = arith.constant 0 : i32
    %c0_i32_2 = arith.constant 0 : i32
    return %c0_i32, %c0_i32_0, %c0_i32_1 : i32, i32, i32
  }
  func.func @transform_2(%arg0: i32, %arg1: i32) -> (i32, i32, i32) {
    %c0_i32 = arith.constant 0 : i32
    %c0_i32_0 = arith.constant 0 : i32
    %c0_i32_1 = arith.constant 0 : i32
    %c0_i32_2 = arith.constant 0 : i32
    return %c0_i32, %c0_i32_0, %c0_i32_1 : i32, i32, i32
  }
  func.func @transform_3(%arg0: i32, %arg1: i32) -> (i32, i32, i32) {
    %c0_i32 = arith.constant 0 : i32
    %c0_i32_0 = arith.constant 0 : i32
    return %arg0, %c0_i32, %arg1 : i32, i32, i32
  }
}

</mosaic_0001>

<llo_original>
// kernel: tpu_custom_call.1
$region0: #{tpu_custom_call.1}
  #allocation0 [shape = 'u32[]', space=smem, size = 0x4, offset = 0x4, fixed_abs, tag = 'smem constant byte address 0x4 - core index']
  #allocation1 [shape = 'u32[144,128]{1,0:T(1,128)}', space=vmem, size = 0x12000, scoped, tag = 'internal scratch']
  %s0 = inlined_call_operand.hbm [shape: f32[2,4,256], index: 0, kind: input, shape index: {}]
  %s1 = inlined_call_operand.vmem [shape: f32[1,4,1], index: 1, kind: input, shape index: {}]
  %s2 = inlined_call_operand.vmem [shape: f32[1,4,1], index: 2, kind: input, shape index: {}]
  %s3 = inlined_call_operand.hbm [shape: f32[2,4,256], index: 3, kind: output, shape index: {}]
  %s4 = sld [smem:[#allocation0]]
  $region26: #{tpu_custom_call.1} parent=0
    _
  %s6 = ssub.s32 1, %s4
  %s7 = scalar_select 0, %s6, %s4
  $region1: #{tpu_custom_call.1} parent=0
    #allocation2 [shape = 'u8[8192]{0}', space=vmem, size = 0x2000, scoped, tag = 'input window, operand 0, single buffered']
    #allocation3 [shape = 's32[1]{0}', space=sflag, size = 0x4, scoped, tag = 'scoped memory for tpu_custom_call.1']
    #allocation4 [shape = 's32[1]{0}', space=sflag, size = 0x4, scoped, tag = 'scoped memory for tpu_custom_call.1']
    #allocation5 [shape = 'u8[8192]{0}', space=vmem, size = 0x2000, scoped, tag = 'output window, operand 0, single buffered']
    %8 = vsyncpa [#allocation3], 0
    %9 = vsyncpa [#allocation4], 0
    // Predicated region
    $region2: #{tpu_custom_call.1} parent=1 // pred_check
      _
    $region3: #{tpu_custom_call.1} parent=1 // pred_check_branch
      %11 = sbr.rel (0) target = $region5
    $region4: #{tpu_custom_call.1} parent=1 // pred_region
      %s13 = ssub.s32 256, 256
      %14 = vsyncadd [#allocation3], %s13
      %s15 = sshll.u32 [#allocation2], 4
      %s16 = int_to_ptr.vmem [resolvable:$true] %s15
      %21 = dma.hbm_to_vmem [thread:$0]  %s0, 256, %s16, [#allocation3], 128, 128, 8
    $region5: #{tpu_custom_call.1} parent=1 // pred_fallthru
      _
    // Predicated region
    $region6: #{tpu_custom_call.1} parent=1 // pred_check
      _
    $region7: #{tpu_custom_call.1} parent=1 // pred_check_branch
      %23 = sbr.rel (0) target = $region9
    $region8: #{tpu_custom_call.1} parent=1 // pred_region
      _
    $region9: #{tpu_custom_call.1} parent=1 // pred_fallthru
      _
    // Predicated region
    $region10: #{tpu_custom_call.1} parent=1 // pred_check
      _
    $region11: #{tpu_custom_call.1} parent=1 // pred_check_branch
      %25 = sbr.rel (0) target = $region13
    $region12: #{tpu_custom_call.1} parent=1 // pred_region
      _
    $region13: #{tpu_custom_call.1} parent=1 // pred_fallthru
      _
    // Predicated region
    $region14: #{tpu_custom_call.1} parent=1 // pred_check
      _
    $region15: #{tpu_custom_call.1} parent=1 // pred_check_branch
      %27 = sbr.rel (0) target = $region17
    $region16: #{tpu_custom_call.1} parent=1 // pred_region
      %28 = dma.done [#allocation3], 256
    $region17: #{tpu_custom_call.1} parent=1 // pred_fallthru
      _
    %v29 = vld [vmem:[#allocation2] sm:$0xff]
    %v30 = vld [vmem:[#allocation2 + $0x8] sm:$0xff]
    %v33 = vcombine.high %v29, %v29
    %v34 = vcombine.high %v30, %v30
    %vm37 = vcmask 1043456
    %v38 = vsel %vm37, %v29, 0.0
    %v39 = vrot.slane %v38, 4
    %v40 = vadd.f32 %v38, %v39
    %v41 = vrot.slane %v40, 2
    %v42 = vadd.f32 %v40, %v41
    %v43 = vrot.slane %v42, 1
    %v44 = vadd.f32 %v42, %v43
    %v45 = vsel %vm37, %v33, 0.0
    %v46 = vrot.slane %v45, 4
    %v47 = vadd.f32 %v45, %v46
    %v48 = vrot.slane %v47, 2
    %v49 = vadd.f32 %v47, %v48
    %v50 = vrot.slane %v49, 1
    %v51 = vadd.f32 %v49, %v50
    %v52 = vsel %vm37, %v30, 0.0
    %v53 = vrot.slane %v52, 4
    %v54 = vadd.f32 %v52, %v53
    %v55 = vrot.slane %v54, 2
    %v56 = vadd.f32 %v54, %v55
    %v57 = vrot.slane %v56, 1
    %v58 = vadd.f32 %v56, %v57
    %v59 = vsel %vm37, %v34, 0.0
    %v60 = vrot.slane %v59, 4
    %v61 = vadd.f32 %v59, %v60
    %v62 = vrot.slane %v61, 2
    %v63 = vadd.f32 %v61, %v62
    %v64 = vrot.slane %v63, 1
    %v65 = vadd.f32 %v63, %v64
    %v66 = vrcp.pop 4.0
    %v67 = vmul.f32 %v44, %v66
    %v68 = vmul.f32 %v51, %v66
    %v69 = vmul.f32 %v58, %v66
    %v70 = vmul.f32 %v65, %v66
    %v75 = vcombine.low %v67, %v68
    %v76 = vcombine.low %v69, %v70
    %v79 = vsub.f32 %v29, %v75
    %v80 = vsub.f32 %v30, %v76
    %v81 = vmul.f32 %v79, %v79
    %v82 = vmul.f32 %v80, %v80
    %v85 = vcombine.high %v81, %v81
    %v86 = vcombine.high %v82, %v82
    %v89 = vsel %vm37, %v81, 0.0
    %v90 = vrot.slane %v89, 4
    %v91 = vadd.f32 %v89, %v90
    %v92 = vrot.slane %v91, 2
    %v93 = vadd.f32 %v91, %v92
    %v94 = vrot.slane %v93, 1
    %v95 = vadd.f32 %v93, %v94
    %v96 = vsel %vm37, %v85, 0.0
    %v97 = vrot.slane %v96, 4
    %v98 = vadd.f32 %v96, %v97
    %v99 = vrot.slane %v98, 2
    %v100 = vadd.f32 %v98, %v99
    %v101 = vrot.slane %v100, 1
    %v102 = vadd.f32 %v100, %v101
    %v103 = vsel %vm37, %v82, 0.0
    %v104 = vrot.slane %v103, 4
    %v105 = vadd.f32 %v103, %v104
    %v106 = vrot.slane %v105, 2
    %v107 = vadd.f32 %v105, %v106
    %v108 = vrot.slane %v107, 1
    %v109 = vadd.f32 %v107, %v108
    %v110 = vsel %vm37, %v86, 0.0
    %v111 = vrot.slane %v110, 4
    %v112 = vadd.f32 %v110, %v111
    %v113 = vrot.slane %v112, 2
    %v114 = vadd.f32 %v112, %v113
    %v115 = vrot.slane %v114, 1
    %v116 = vadd.f32 %v114, %v115
    %v117 = vmul.f32 %v95, %v66
    %v118 = vmul.f32 %v102, %v66
    %v119 = vmul.f32 %v109, %v66
    %v120 = vmul.f32 %v116, %v66
    %v121 = vadd.f32 %v117, 1e-05
    %v122 = vadd.f32 %v118, 1e-05
    %v123 = vadd.f32 %v119, 1e-05
    %v124 = vadd.f32 %v120, 1e-05
    %v125 = vrsqrt.pop %v121
    %v126 = vrsqrt.pop %v122
    %v127 = vrsqrt.pop %v123
    %v128 = vrsqrt.pop %v124
    %v129 = vld [vmem:[%s1] sm:$0xf]
    %v130 = vld [vmem:[%s2] sm:$0xf]
    %v135 = vcombine.low %v125, %v126
    %v136 = vcombine.low %v127, %v128
    %v139 = vmul.f32 %v79, %v135
    %v140 = vmul.f32 %v80, %v136
    %142 = vset.pattern.permute.xlu0 0
    %143 = vperm.xlu0 %142, %v129
    %v144 = vpop.permute.xlu0 %143
    %v146 = vunpack.c.l.s4 839922192
    %v147 = vunpack.c.0.s8 %v146
    %v148 = vlaneseq
    %v149 = vshrl.u32 %v148, 7
    %v150 = vsub.s32 %v147, %v149
    %v151 = vrot.slane %v144, %v150
    %v153 = vmul.f32 %v139, %v151
    %v154 = vmul.f32 %v140, %v151
    %156 = vset.pattern.permute.xlu0 0
    %157 = vperm.xlu0 %156, %v130
    %v158 = vpop.permute.xlu0 %157
    %v160 = vunpack.c.l.s4 839922192
    %v161 = vunpack.c.0.s8 %v160
    %v162 = vlaneseq
    %v163 = vshrl.u32 %v162, 7
    %v164 = vsub.s32 %v161, %v163
    %v165 = vrot.slane %v158, %v164
    %v167 = vadd.f32 %v153, %v165
    %v168 = vadd.f32 %v154, %v165
    %169 = vst [vmem:[#allocation5] sm:$0xff] %v167
    %170 = vst [vmem:[#allocation5 + $0x8] sm:$0xff] %v168
    // Predicated region
    $region18: #{tpu_custom_call.1} parent=1 // pred_check
      _
    $region19: #{tpu_custom_call.1} parent=1 // pred_check_branch
      %172 = sbr.rel (0) target = $region21
    $region20: #{tpu_custom_call.1} parent=1 // pred_region
      %s174 = ssub.s32 256, 256
      %175 = vsyncadd [#allocation4], %s174
      %s176 = sshll.u32 [#allocation5], 4
      %s177 = int_to_ptr.vmem [resolvable:$true] %s176
      %182 = dma.vmem_to_hbm [thread:$0]  %s177, 256, %s3, [#allocation4], 128, 128, 8
    $region21: #{tpu_custom_call.1} parent=1 // pred_fallthru
      _
    // Predicated region
    $region22: #{tpu_custom_call.1} parent=1 // pred_check
      _
    $region23: #{tpu_custom_call.1} parent=1 // pred_check_branch
      %184 = sbr.rel (0) target = $region25
    $region24: #{tpu_custom_call.1} parent=1 // pred_region
      %185 = dma.done [#allocation4], 256
    $region25: #{tpu_custom_call.1} parent=1 // pred_fallthru
      _
    %186 = vsyncpa [#allocation3], 1
    %187 = vsyncpa [#allocation4], 1

</llo_original>
